<compile_context>
chip_gen: v7x
topology: tpu7x:2x2x1
jax: 0.10.0
libtpu: 0.0.40
codegen_flags: <defaults>
</compile_context>

<pallas_src>
import jax
import jax.numpy as jnp
from jax.experimental import pallas as pl
from jax.experimental.pallas import tpu as pltpu


THRESHOLD_POS = 0.5
THRESHOLD_NEG = -0.5

# Arrays at or below this size run as a single block (block dims == array dims,
# so the (8,128) divisibility rule is vacuous and per-step overhead is paid
# exactly once).
_SINGLE_BLOCK_MAX_BYTES = 512 * 1024
# Above that, force at least this many grid steps so DMA-in of block i+1
# overlaps the store of block i, and v7x megacore can shard the grid.
_MIN_GRID_STEPS = 4
# Ragged fallback: lane-blocked (1, n) view.  64K lanes keeps the per-buffer
# VMEM footprint ~2 MiB even though a (1, N) window pads its sublane dimension
# up to a full packed tile.
_RAGGED_BLOCK_LANES = 64 * 1024


def _chip_config():
    """Return (target_block_bytes, vmem_limit_bytes_or_None) per TPU generation."""
    try:
        kind = jax.devices()[0].device_kind.lower()
    except Exception:
        kind = ""
    if "v7" in kind or "7x" in kind:
        # ~3.2 TB/s per-TC HBM: 2 MiB blocks would be ~1.3 us of DMA, so the
        # ~0.35 us per-step overhead becomes a visible tax.  8 MiB blocks keep
        # large tensors at the HBM roofline; 4 double-buffered blocks = 32 MiB
        # resident, so raise the scoped VMEM limit above the 32 MiB default.
        return 8 * 1024 * 1024, 48 * 1024 * 1024
    if "v6" in kind:
        # 4 MiB blocks (16 MiB resident) fit the 32 MiB default scoped VMEM.
        return 4 * 1024 * 1024, None
    # v5e (and unknown): 2 MiB blocks (8 MiB resident) stay under the 16 MiB
    # default scoped VMEM limit.
    return 2 * 1024 * 1024, None


def _sublane_granule(dtype) -> int:
    """Rows per packed sublane group: 8 for 32-bit, 16 for 16-bit, 32 for 8-bit."""
    itemsize = jnp.dtype(dtype).itemsize
    return {4: 8, 2: 16, 1: 32}.get(itemsize, 8)


def _ternary_kernel(x_ref, o_ref):
    x = x_ref[...]
    ones = jnp.ones_like(x)
    out = jnp.where(x > THRESHOLD_POS, ones, jnp.zeros_like(x))
    o_ref[...] = jnp.where(x < THRESHOLD_NEG, -ones, out)


def _ternary_call(x2d, block_shape, index_map, grid, vmem_limit, donate):
    n = x2d.size
    itemsize = jnp.dtype(x2d.dtype).itemsize
    cost = pl.CostEstimate(
        flops=4 * n,                        # 2 cmps + 2 selects per element
        bytes_accessed=2 * n * itemsize,    # one read + one write
        transcendentals=0,
    )
    cp_kwargs = dict(dimension_semantics=("parallel",))
    if vmem_limit is not None:
        cp_kwargs["vmem_limit_bytes"] = vmem_limit
    return pl.pallas_call(
        _ternary_kernel,
        out_shape=jax.ShapeDtypeStruct(x2d.shape, x2d.dtype),
        grid_spec=pltpu.PrefetchScalarGridSpec(
            num_scalar_prefetch=0,
            grid=grid,
            in_specs=[pl.BlockSpec(block_shape, index_map)],
            out_specs=pl.BlockSpec(block_shape, index_map),
        ),
        compiler_params=pltpu.CompilerParams(**cp_kwargs),
        cost_estimate=cost,
        input_output_aliases={0: 0} if donate else {},
    )(x2d)


def _ternary_rows(x2d: jax.Array, donate: bool) -> jax.Array:
    """Fast path over a (rows, lanes) slab; lanes % 128 == 0."""
    rows, lanes = x2d.shape
    itemsize = jnp.dtype(x2d.dtype).itemsize
    granule = _sublane_granule(x2d.dtype)
    block_bytes, vmem_limit = _chip_config()
    total_bytes = rows * lanes * itemsize

    if total_bytes <= _SINGLE_BLOCK_MAX_BYTES or rows <= granule:
        # Small array: single block covering the full array (block dims ==
        # array dims, so the (8,128) divisibility constraint does not apply).
        tr, grid = rows, (1,)
    else:
        # Cap by the per-generation block byte budget...
        tr_cap = max(granule, (block_bytes // (lanes * itemsize)) // granule * granule)
        # ...but never collapse below _MIN_GRID_STEPS blocks: >=2 steps gives
        # DMA/store overlap, >=4 feeds both v7x TensorCores.
        tr_steps = max(granule, (pl.cdiv(rows, _MIN_GRID_STEPS) // granule) * granule)
        tr = min(tr_cap, tr_steps)
        # Non-divisible grids are fine: the last partial block is padded on
        # read and the out-of-range portion of the store is discarded.
        grid = (pl.cdiv(rows, tr),)

    return _ternary_call(x2d, (tr, lanes), lambda i: (i, 0), grid, vmem_limit, donate)


def _ternary_ragged(x2d: jax.Array, donate: bool) -> jax.Array:
    """Ragged path over a (1, n) contiguous view; n need not divide 128."""
    _, n = x2d.shape
    _, vmem_limit = _chip_config()
    if n <= _RAGGED_BLOCK_LANES:
        bl, grid = n, (1,)           # block == full array dims -> exempt
    else:
        bl = _RAGGED_BLOCK_LANES     # multiple of 128
        grid = (pl.cdiv(n, bl),)     # last block: padded read, masked store
    return _ternary_call(x2d, (1, bl), lambda i: (0, i), grid, vmem_limit, donate)


def ternary_neuron(x: jax.Array, donate: bool = False) -> jax.Array:
    """Apply the ternary thresholding elementwise. Any shape, float dtype.

    Set donate=True (and donate x at the jit boundary) for an in-place variant
    via input_output_aliases -- avoids a second full-size HBM buffer.
    """
    orig_shape = x.shape
    n = x.size
    if n == 0:
        return x

    if n % 128 == 0:
        # Fast path: only free contiguous reshapes.  Widen the last dim as much
        # as cleanly possible for lane-dense, unmasked stores.
        lanes = 128
        for cand in (1024, 512, 256):
            if n % cand == 0:
                lanes = cand
                break
        out2d = _ternary_rows(x.reshape(n // lanes, lanes), donate)
        return out2d.reshape(orig_shape)

    # Ragged element count: run directly over the unpadded flat view (free
    # reshape).  No wrapper-side jnp.pad / slice -> no extra HBM traffic.
    out2d = _ternary_ragged(x.reshape(1, n), donate)
    return out2d.reshape(orig_shape)


def ternary_neuron_ref(x: jax.Array) -> jax.Array:
    """Pure-JAX reference matching the PyTorch module."""
    out = jnp.zeros_like(x)
    out = jnp.where(x > THRESHOLD_POS, jnp.ones_like(x), out)
    out = jnp.where(x < THRESHOLD_NEG, -jnp.ones_like(x), out)
    return out


if __name__ == "__main__":
    key = jax.random.PRNGKey(0)

    # Small NCHW input consistent with a conv-style model: (B=2, C=4, H=16, W=16).
    x = jax.random.normal(key, (2, 4, 16, 16), dtype=jnp.float32) * 1.5
    y = jax.block_until_ready(ternary_neuron(x))
    y_ref = ternary_neuron_ref(x)
    assert y.shape == x.shape and y.dtype == x.dtype
    assert jnp.array_equal(y, y_ref), "mismatch vs reference (fast path)"

    # Ragged element count exercises the unpadded (1, n) lane-blocked path.
    x2 = jax.random.normal(jax.random.PRNGKey(1), (3, 5, 7), dtype=jnp.float32) * 1.5
    y2 = jax.block_until_ready(ternary_neuron(x2))
    assert y2.shape == x2.shape and y2.dtype == x2.dtype
    assert jnp.array_equal(y2, ternary_neuron_ref(x2)), "mismatch vs reference (ragged path)"

    # Larger activation (1 MiB f32) exercises the forced multi-step pipelined path.
    x3 = jax.random.normal(jax.random.PRNGKey(2), (8, 8, 64, 64), dtype=jnp.float32) * 1.5
    y3 = jax.block_until_ready(ternary_neuron(x3))
    assert jnp.array_equal(y3, ternary_neuron_ref(x3)), "mismatch vs reference (multi-block path)"

    # bf16 dtype preservation (thresholds +-0.5 are exactly representable).
    x4 = (jax.random.normal(jax.random.PRNGKey(3), (2, 4, 16, 16)) * 1.5).astype(jnp.bfloat16)
    y4 = jax.block_until_ready(ternary_neuron(x4))
    assert y4.dtype == jnp.bfloat16
    assert jnp.array_equal(y4, ternary_neuron_ref(x4)), "mismatch vs reference (bf16 path)"

    print("KERNEL_OK")
</pallas_src>

<mosaic_0001>
module attributes {stable_mosaic.version = 11 : i64} {
  func.func @_ternary_kernel(%arg0: i32, %arg1: memref<2x1024xf32, #tpu.memory_space<vmem>>, %arg2: memref<2x1024xf32, #tpu.memory_space<vmem>>) attributes {dimension_semantics = [#tpu.dimension_semantics<parallel>], iteration_bounds = array<i64: 1>, scalar_prefetch = 0 : i64, scratch_operands = 0 : i64, tpu.core_type = #tpu.core_type<tc>, window_params = [{transform_indices = @transform_0, window_bounds = array<i64: 2, 1024>}, {transform_indices = @transform_1, window_bounds = array<i64: 2, 1024>}]} {
    %c0 = arith.constant 0 : index
    %c0_0 = arith.constant 0 : index
    %0 = vector.load %arg1[%c0, %c0_0] : memref<2x1024xf32, #tpu.memory_space<vmem>>, vector<2x1024xf32>
    %cst = arith.constant 1.000000e+00 : f32
    %1 = vector.broadcast %cst : f32 to vector<2x1024xf32>
    %cst_1 = arith.constant 5.000000e-01 : f32
    %2 = vector.broadcast %cst_1 : f32 to vector<2x1024xf32>
    %3 = arith.cmpf ogt, %0, %2 : vector<2x1024xf32>
    %cst_2 = arith.constant 0.000000e+00 : f32
    %4 = vector.broadcast %cst_2 : f32 to vector<2x1024xf32>
    %5 = arith.select %3, %1, %4 : vector<2x1024xi1>, vector<2x1024xf32>
    %cst_3 = arith.constant -5.000000e-01 : f32
    %6 = vector.broadcast %cst_3 : f32 to vector<2x1024xf32>
    %7 = arith.cmpf olt, %0, %6 : vector<2x1024xf32>
    %cst_4 = arith.constant 0.000000e+00 : f32
    %8 = vector.broadcast %cst_4 : f32 to vector<2x1024xf32>
    %9 = arith.subf %8, %1 : vector<2x1024xf32>
    %10 = arith.select %7, %9, %5 : vector<2x1024xi1>, vector<2x1024xf32>
    %c0_5 = arith.constant 0 : index
    %c0_6 = arith.constant 0 : index
    %11 = vector.load %arg2[%c0_5, %c0_6] : memref<2x1024xf32, #tpu.memory_space<vmem>>, vector<2x1024xf32>
    tpu.vector_store %arg2[%c0_5, %c0_6], %10 {strides = array<i32>} : memref<2x1024xf32, #tpu.memory_space<vmem>>, vector<2x1024xf32>,
    return
  }
  func.func @transform_0(%arg0: i32) -> (i32, i32) {
    %c0_i32 = arith.constant 0 : i32
    %c0_i32_0 = arith.constant 0 : i32
    return %arg0, %c0_i32 : i32, i32
  }
  func.func @transform_1(%arg0: i32) -> (i32, i32) {
    %c0_i32 = arith.constant 0 : i32
    %c0_i32_0 = arith.constant 0 : i32
    return %arg0, %c0_i32 : i32, i32
  }
}

</mosaic_0001>

<llo_original>
// kernel: tpu_custom_call.1
$region0: #{tpu_custom_call.1}
  #allocation0 [shape = 'u32[]', space=smem, size = 0x4, offset = 0x4, fixed_abs, tag = 'smem constant byte address 0x4 - core index']
  #allocation1 [shape = 'u32[144,128]{1,0:T(1,128)}', space=vmem, size = 0x12000, scoped, tag = 'internal scratch']
  %s0 = inlined_call_operand.hbm [shape: f32[2,1024], index: 0, kind: input, shape index: {}]
  %s1 = inlined_call_operand.hbm [shape: f32[2,1024], index: 1, kind: output, shape index: {}]
  %s2 = sld [smem:[#allocation0]]
  $region18: #{tpu_custom_call.1} parent=0
    _
  %s4 = ssub.s32 1, %s2
  %s5 = scalar_select 0, %s4, %s2
  $region1: #{tpu_custom_call.1} parent=0
    #allocation2 [shape = 'u8[8192]{0}', space=vmem, size = 0x2000, scoped, tag = 'input window, operand 0, single buffered']
    #allocation3 [shape = 's32[1]{0}', space=sflag, size = 0x4, scoped, tag = 'scoped memory for tpu_custom_call.1']
    #allocation4 [shape = 's32[1]{0}', space=sflag, size = 0x4, scoped, tag = 'scoped memory for tpu_custom_call.1']
    #allocation5 [shape = 'u8[8192]{0}', space=vmem, size = 0x2000, scoped, tag = 'output window, operand 0, single buffered']
    %6 = vsyncpa [#allocation3], 0
    %7 = vsyncpa [#allocation4], 0
    // Predicated region
    $region2: #{tpu_custom_call.1} parent=1 // pred_check
      _
    $region3: #{tpu_custom_call.1} parent=1 // pred_check_branch
      %9 = sbr.rel (0) target = $region5
    $region4: #{tpu_custom_call.1} parent=1 // pred_region
      %s11 = ssub.s32 256, 256
      %12 = vsyncadd [#allocation3], %s11
      %s14 = sshll.u32 [#allocation2], 4
      %s15 = int_to_ptr.vmem [resolvable:$true] %s14
      %17 = dma.hbm_to_vmem [thread:$0]  %s0, 256, %s15, [#allocation3]
    $region5: #{tpu_custom_call.1} parent=1 // pred_fallthru
      _
    // Predicated region
    $region6: #{tpu_custom_call.1} parent=1 // pred_check
      _
    $region7: #{tpu_custom_call.1} parent=1 // pred_check_branch
      %19 = sbr.rel (0) target = $region9
    $region8: #{tpu_custom_call.1} parent=1 // pred_region
      %20 = dma.done [#allocation3], 256
    $region9: #{tpu_custom_call.1} parent=1 // pred_fallthru
      _
    %v21 = vld [vmem:[#allocation2] sm:$0xff]
    %v22 = vld [vmem:[#allocation2 + $0x8] sm:$0xff]
    %vm23 = vcmp.gt.f32.partialorder %v21, 0.5
    %vm24 = vcmp.gt.f32.partialorder %v22, 0.5
    %v25 = vsel %vm23, 1.0, 0.0
    %v26 = vsel %vm24, 1.0, 0.0
    %vm27 = vcmp.lt.f32.partialorder %v21, -0.5
    %vm28 = vcmp.lt.f32.partialorder %v22, -0.5
    %v29 = vsel %vm27, -1.0, %v25
    %v30 = vsel %vm28, -1.0, %v26
    %31 = vst [vmem:[#allocation5] sm:$0xff] %v29
    %32 = vst [vmem:[#allocation5 + $0x8] sm:$0xff] %v30
    // Predicated region
    $region10: #{tpu_custom_call.1} parent=1 // pred_check
      _
    $region11: #{tpu_custom_call.1} parent=1 // pred_check_branch
      %34 = sbr.rel (0) target = $region13
    $region12: #{tpu_custom_call.1} parent=1 // pred_region
      %s36 = ssub.s32 256, 256
      %37 = vsyncadd [#allocation4], %s36
      %s39 = sshll.u32 [#allocation5], 4
      %s40 = int_to_ptr.vmem [resolvable:$true] %s39
      %42 = dma.vmem_to_hbm [thread:$0]  %s40, 256, %s1, [#allocation4]
    $region13: #{tpu_custom_call.1} parent=1 // pred_fallthru
      _
    // Predicated region
    $region14: #{tpu_custom_call.1} parent=1 // pred_check
      _
    $region15: #{tpu_custom_call.1} parent=1 // pred_check_branch
      %44 = sbr.rel (0) target = $region17
    $region16: #{tpu_custom_call.1} parent=1 // pred_region
      %45 = dma.done [#allocation4], 256
    $region17: #{tpu_custom_call.1} parent=1 // pred_fallthru
      _
    %46 = vsyncpa [#allocation3], 1
    %47 = vsyncpa [#allocation4], 1

</llo_original>
